<compile_context>
chip_gen: v7x
topology: tpu7x:2x2x1
jax: 0.10.0
libtpu: 0.0.40
codegen_flags: <defaults>
</compile_context>

<pallas_src>
import jax
import jax.numpy as jnp
from jax.experimental import pallas as pl
from jax.experimental.pallas import tpu as pltpu

# (in_features, out_features) for fc1..fc7
LAYER_DIMS = [(3, 10), (10, 10), (10, 10), (10, 10), (10, 10), (10, 10), (10, 2)]
NUM_LAYERS = len(LAYER_DIMS)
PAD = 16              # padded hidden width (holds 10 features + ones row)
PAD_IN = 8            # padded input width (f32 sublane floor; 3 features + ones row)
ONES_ROW = PAD - 1        # row 15: constant 1.0 in the 16-wide hidden state
ONES_ROW_IN = PAD_IN - 1  # row 7 : constant 1.0 in the 8-wide input slab
OUT_DIM = LAYER_DIMS[-1][1]


def _mlp_kernel(w_ref, x_ref, o_ref):
    """w_ref: (7,16,16) packed weights+bias, x_ref: (8, TB), o_ref: (2, TB)."""
    # fc1: (16,8) @ (8,TB).  Bias folded via ones row (row 7 of x, col 7 of w0).
    w0 = w_ref[0][:, :PAD_IN]
    h = jnp.maximum(
        jnp.dot(w0, x_ref[...], preferred_element_type=jnp.float32), 0.0)
    # fc2..fc6: (16,16) @ (16,TB), lane-dense, bias via ones row 15 / col 15.
    for i in range(1, NUM_LAYERS - 1):
        h = jnp.maximum(
            jnp.dot(w_ref[i], h, preferred_element_type=jnp.float32), 0.0)
    # fc7: no activation.
    h = jnp.dot(w_ref[NUM_LAYERS - 1], h, preferred_element_type=jnp.float32)
    o_ref[...] = h[0:OUT_DIM, :].astype(o_ref.dtype)


def pack_params(params):
    """params: list of (W (out,in), b (out,)) in PyTorch orientation.
    Returns one (7, PAD, PAD) f32 slab:
      layer 0 : slab[0, :out, :in] = W1, slab[0, :out, 7]  = b1, slab[0, 15, 7]  = 1
      layer i : slab[i, :out, :in] = Wi, slab[i, :out, 15] = bi, slab[i, 15, 15] = 1
    The trailing 1 re-creates the constant-ones row in each layer's output so the
    bias trick survives through all 7 layers (and the intervening ReLUs)."""
    slabs = []
    for li, (w, b) in enumerate(params):
        out_f, in_f = w.shape
        bias_col = ONES_ROW_IN if li == 0 else ONES_ROW
        wf = jnp.zeros((PAD, PAD), jnp.float32)
        wf = wf.at[:out_f, :in_f].set(w.astype(jnp.float32))
        wf = wf.at[:out_f, bias_col].set(b.astype(jnp.float32))
        wf = wf.at[ONES_ROW, bias_col].set(1.0)
        slabs.append(wf)
    return jnp.stack(slabs)  # (7, PAD, PAD)


def _choose_tb(batch, max_tb):
    """Batch tile: multiple of 128 lanes, <= max_tb, and sized so the grid has
    at least 2 steps when the batch allows it (megacore sharding on v7x)."""
    half = pl.cdiv(batch, 2)
    tb = pl.cdiv(half, 128) * 128
    tb = min(tb, max_tb)
    return max(tb, 128)


def net_forward(x, packed_w, *, max_tb=16384):
    """x: (B, 3) float32. packed_w: (7, 16, 16) from pack_params."""
    B, F = x.shape
    TB = _choose_tb(B, max_tb)
    B_pad = pl.cdiv(B, TB) * TB

    # Layout plumbing outside the kernel: batch-on-lanes, zero-pad features to
    # 8 rows, inject the constant-ones row used to fuse the bias into the matmul.
    xt = jnp.zeros((PAD_IN, B_pad), jnp.float32)
    xt = xt.at[:F, :B].set(x.T.astype(jnp.float32))
    xt = xt.at[ONES_ROW_IN, :].set(1.0)

    out_t = pl.pallas_call(
        _mlp_kernel,
        out_shape=jax.ShapeDtypeStruct((OUT_DIM, B_pad), jnp.float32),
        grid=(B_pad // TB,),
        in_specs=[
            # One packed slab, constant index_map -> fetched once, VMEM-resident.
            pl.BlockSpec((NUM_LAYERS, PAD, PAD), lambda i: (0, 0, 0)),
            # Batch tiles of the (features, batch) input.
            pl.BlockSpec((PAD_IN, TB), lambda i: (0, i)),
        ],
        out_specs=pl.BlockSpec((OUT_DIM, TB), lambda i: (0, i)),
        compiler_params=pltpu.CompilerParams(
            dimension_semantics=("parallel",)),
    )(packed_w, xt)

    # Padded batch lanes carry bias-propagated garbage (their ones row is set);
    # the [:, :B] slice below is what discards it -- do not remove.
    return out_t[:, :B].T  # (B, 2)


def init_params(key):
    """PyTorch nn.Linear default init: U(-1/sqrt(in), 1/sqrt(in)) for W and b.
    Weights stored in PyTorch orientation (out_features, in_features)."""
    params = []
    for (fin, fout) in LAYER_DIMS:
        key, kw, kb = jax.random.split(key, 3)
        bound = 1.0 / jnp.sqrt(jnp.float32(fin))
        w = jax.random.uniform(kw, (fout, fin), jnp.float32, -bound, bound)
        b = jax.random.uniform(kb, (fout,), jnp.float32, -bound, bound)
        params.append((w, b))
    return params


def reference_forward(x, params):
    """Pure-JAX reference (PyTorch semantics: x @ W.T + b, ReLU between layers)."""
    h = x
    for i, (w, b) in enumerate(params):
        h = h @ w.T + b
        if i < len(params) - 1:
            h = jnp.maximum(h, 0.0)
    return h


if __name__ == "__main__":
    key = jax.random.PRNGKey(0)
    key, kx, kx2 = jax.random.split(key, 3)

    params = init_params(key)
    packed_w = pack_params(params)

    # Small-batch check (B = 8), single grid step.
    B = 8
    x = jax.random.normal(kx, (B, 3), jnp.float32)
    out = jax.block_until_ready(net_forward(x, packed_w))
    ref = reference_forward(x, params)
    assert out.shape == (B, 2)
    assert jnp.allclose(out, ref, atol=1e-5, rtol=1e-5)

    # Larger-batch check exercising a 2-step batch grid (B = 1000 -> TB = 512).
    B2 = 1000
    x2 = jax.random.normal(kx2, (B2, 3), jnp.float32)
    out2 = jax.block_until_ready(net_forward(x2, packed_w))
    ref2 = reference_forward(x2, params)
    assert out2.shape == (B2, 2)
    assert jnp.allclose(out2, ref2, atol=1e-5, rtol=1e-5)

    print("KERNEL_OK")
</pallas_src>

<mosaic_0001>
module attributes {stable_mosaic.version = 11 : i64} {
  func.func @_mlp_kernel(%arg0: i32, %arg1: memref<7x16x16xf32, #tpu.memory_space<vmem>>, %arg2: memref<8x128xf32, #tpu.memory_space<vmem>>, %arg3: memref<2x128xf32, #tpu.memory_space<vmem>>) attributes {dimension_semantics = [#tpu.dimension_semantics<parallel>], iteration_bounds = array<i64: 1>, scalar_prefetch = 0 : i64, scratch_operands = 0 : i64, tpu.core_type = #tpu.core_type<tc>, window_params = [{pipeline_mode = #tpu.pipeline_mode<synchronous>, transform_indices = @transform_0, window_bounds = array<i64: 7, 16, 16>}, {transform_indices = @transform_1, window_bounds = array<i64: 8, 128>}, {transform_indices = @transform_2, window_bounds = array<i64: 2, 128>}]} {
    %c0 = arith.constant 0 : index
    %c0_0 = arith.constant 0 : index
    %c0_1 = arith.constant 0 : index
    %0 = vector.load %arg1[%c0, %c0_0, %c0_1] : memref<7x16x16xf32, #tpu.memory_space<vmem>>, vector<1x16x16xf32>
    %1 = vector.shape_cast %0 : vector<1x16x16xf32> to vector<16x16xf32>
    %2 = vector.extract_strided_slice %1 {offsets = [0, 0], sizes = [16, 8], strides = [1, 1]} : vector<16x16xf32> to vector<16x8xf32>
    %c0_2 = arith.constant 0 : index
    %c0_3 = arith.constant 0 : index
    %3 = vector.load %arg2[%c0_2, %c0_3] : memref<8x128xf32, #tpu.memory_space<vmem>>, vector<8x128xf32>
    %cst = arith.constant dense<0.000000e+00> : vector<16x128xf32>
    %4 = tpu.matmul %2, %3, %cst {dimension_numbers = #tpu.dot_dimension_numbers<[1], [0], [0], [1], [0, 0, 1, 1], [], []>} : vector<16x8xf32>, vector<8x128xf32>, vector<16x128xf32> -> vector<16x128xf32>
    %cst_4 = arith.constant 0.000000e+00 : f32
    %5 = vector.broadcast %cst_4 : f32 to vector<16x128xf32>
    %6 = arith.maximumf %4, %5 : vector<16x128xf32>
    %c1 = arith.constant 1 : index
    %c0_5 = arith.constant 0 : index
    %c0_6 = arith.constant 0 : index
    %7 = vector.load %arg1[%c1, %c0_5, %c0_6] : memref<7x16x16xf32, #tpu.memory_space<vmem>>, vector<1x16x16xf32>
    %8 = vector.shape_cast %7 : vector<1x16x16xf32> to vector<16x16xf32>
    %cst_7 = arith.constant dense<0.000000e+00> : vector<16x128xf32>
    %9 = tpu.matmul %8, %6, %cst_7 {dimension_numbers = #tpu.dot_dimension_numbers<[1], [0], [0], [1], [0, 0, 1, 1], [], []>} : vector<16x16xf32>, vector<16x128xf32>, vector<16x128xf32> -> vector<16x128xf32>
    %cst_8 = arith.constant 0.000000e+00 : f32
    %10 = vector.broadcast %cst_8 : f32 to vector<16x128xf32>
    %11 = arith.maximumf %9, %10 : vector<16x128xf32>
    %c2 = arith.constant 2 : index
    %c0_9 = arith.constant 0 : index
    %c0_10 = arith.constant 0 : index
    %12 = vector.load %arg1[%c2, %c0_9, %c0_10] : memref<7x16x16xf32, #tpu.memory_space<vmem>>, vector<1x16x16xf32>
    %13 = vector.shape_cast %12 : vector<1x16x16xf32> to vector<16x16xf32>
    %cst_11 = arith.constant dense<0.000000e+00> : vector<16x128xf32>
    %14 = tpu.matmul %13, %11, %cst_11 {dimension_numbers = #tpu.dot_dimension_numbers<[1], [0], [0], [1], [0, 0, 1, 1], [], []>} : vector<16x16xf32>, vector<16x128xf32>, vector<16x128xf32> -> vector<16x128xf32>
    %cst_12 = arith.constant 0.000000e+00 : f32
    %15 = vector.broadcast %cst_12 : f32 to vector<16x128xf32>
    %16 = arith.maximumf %14, %15 : vector<16x128xf32>
    %c3 = arith.constant 3 : index
    %c0_13 = arith.constant 0 : index
    %c0_14 = arith.constant 0 : index
    %17 = vector.load %arg1[%c3, %c0_13, %c0_14] : memref<7x16x16xf32, #tpu.memory_space<vmem>>, vector<1x16x16xf32>
    %18 = vector.shape_cast %17 : vector<1x16x16xf32> to vector<16x16xf32>
    %cst_15 = arith.constant dense<0.000000e+00> : vector<16x128xf32>
    %19 = tpu.matmul %18, %16, %cst_15 {dimension_numbers = #tpu.dot_dimension_numbers<[1], [0], [0], [1], [0, 0, 1, 1], [], []>} : vector<16x16xf32>, vector<16x128xf32>, vector<16x128xf32> -> vector<16x128xf32>
    %cst_16 = arith.constant 0.000000e+00 : f32
    %20 = vector.broadcast %cst_16 : f32 to vector<16x128xf32>
    %21 = arith.maximumf %19, %20 : vector<16x128xf32>
    %c4 = arith.constant 4 : index
    %c0_17 = arith.constant 0 : index
    %c0_18 = arith.constant 0 : index
    %22 = vector.load %arg1[%c4, %c0_17, %c0_18] : memref<7x16x16xf32, #tpu.memory_space<vmem>>, vector<1x16x16xf32>
    %23 = vector.shape_cast %22 : vector<1x16x16xf32> to vector<16x16xf32>
    %cst_19 = arith.constant dense<0.000000e+00> : vector<16x128xf32>
    %24 = tpu.matmul %23, %21, %cst_19 {dimension_numbers = #tpu.dot_dimension_numbers<[1], [0], [0], [1], [0, 0, 1, 1], [], []>} : vector<16x16xf32>, vector<16x128xf32>, vector<16x128xf32> -> vector<16x128xf32>
    %cst_20 = arith.constant 0.000000e+00 : f32
    %25 = vector.broadcast %cst_20 : f32 to vector<16x128xf32>
    %26 = arith.maximumf %24, %25 : vector<16x128xf32>
    %c5 = arith.constant 5 : index
    %c0_21 = arith.constant 0 : index
    %c0_22 = arith.constant 0 : index
    %27 = vector.load %arg1[%c5, %c0_21, %c0_22] : memref<7x16x16xf32, #tpu.memory_space<vmem>>, vector<1x16x16xf32>
    %28 = vector.shape_cast %27 : vector<1x16x16xf32> to vector<16x16xf32>
    %cst_23 = arith.constant dense<0.000000e+00> : vector<16x128xf32>
    %29 = tpu.matmul %28, %26, %cst_23 {dimension_numbers = #tpu.dot_dimension_numbers<[1], [0], [0], [1], [0, 0, 1, 1], [], []>} : vector<16x16xf32>, vector<16x128xf32>, vector<16x128xf32> -> vector<16x128xf32>
    %cst_24 = arith.constant 0.000000e+00 : f32
    %30 = vector.broadcast %cst_24 : f32 to vector<16x128xf32>
    %31 = arith.maximumf %29, %30 : vector<16x128xf32>
    %c6 = arith.constant 6 : index
    %c0_25 = arith.constant 0 : index
    %c0_26 = arith.constant 0 : index
    %32 = vector.load %arg1[%c6, %c0_25, %c0_26] : memref<7x16x16xf32, #tpu.memory_space<vmem>>, vector<1x16x16xf32>
    %33 = vector.shape_cast %32 : vector<1x16x16xf32> to vector<16x16xf32>
    %cst_27 = arith.constant dense<0.000000e+00> : vector<16x128xf32>
    %34 = tpu.matmul %33, %31, %cst_27 {dimension_numbers = #tpu.dot_dimension_numbers<[1], [0], [0], [1], [0, 0, 1, 1], [], []>} : vector<16x16xf32>, vector<16x128xf32>, vector<16x128xf32> -> vector<16x128xf32>
    %35 = vector.extract_strided_slice %34 {offsets = [0, 0], sizes = [2, 128], strides = [1, 1]} : vector<16x128xf32> to vector<2x128xf32>
    %c0_28 = arith.constant 0 : index
    %c0_29 = arith.constant 0 : index
    %36 = vector.load %arg3[%c0_28, %c0_29] : memref<2x128xf32, #tpu.memory_space<vmem>>, vector<2x128xf32>
    tpu.vector_store %arg3[%c0_28, %c0_29], %35 {strides = array<i32>} : memref<2x128xf32, #tpu.memory_space<vmem>>, vector<2x128xf32>,
    return
  }
  func.func @transform_0(%arg0: i32) -> (i32, i32, i32) {
    %c0_i32 = arith.constant 0 : i32
    %c0_i32_0 = arith.constant 0 : i32
    %c0_i32_1 = arith.constant 0 : i32
    %c0_i32_2 = arith.constant 0 : i32
    return %c0_i32, %c0_i32_0, %c0_i32_1 : i32, i32, i32
  }
  func.func @transform_1(%arg0: i32) -> (i32, i32) {
    %c0_i32 = arith.constant 0 : i32
    %c0_i32_0 = arith.constant 0 : i32
    return %c0_i32, %arg0 : i32, i32
  }
  func.func @transform_2(%arg0: i32) -> (i32, i32) {
    %c0_i32 = arith.constant 0 : i32
    %c0_i32_0 = arith.constant 0 : i32
    return %c0_i32, %arg0 : i32, i32
  }
}

</mosaic_0001>

<llo_original>
// kernel: tpu_custom_call.1
$region0: #{tpu_custom_call.1}
  #allocation0 [shape = 'u32[]', space=smem, size = 0x4, offset = 0x4, fixed_abs, tag = 'smem constant byte address 0x4 - core index']
  #allocation1 [shape = 'u32[144,128]{1,0:T(1,128)}', space=vmem, size = 0x12000, scoped, tag = 'internal scratch']
  %s0 = inlined_call_operand.hbm [shape: f32[7,16,16], index: 0, kind: input, shape index: {}]
  %s1 = inlined_call_operand.hbm [shape: f32[8,128], index: 1, kind: input, shape index: {}]
  %s2 = inlined_call_operand.hbm [shape: f32[2,128], index: 2, kind: output, shape index: {}]
  %s3 = sld [smem:[#allocation0]]
  $region26: #{tpu_custom_call.1} parent=0
    _
  %s5 = ssub.s32 1, %s3
  %s6 = scalar_select 0, %s5, %s3
  $region1: #{tpu_custom_call.1} parent=0
    #allocation2 [shape = 'u8[57344]{0}', space=vmem, size = 0xe000, scoped, tag = 'input window, operand 0, single buffered']
    #allocation3 [shape = 's32[1]{0}', space=sflag, size = 0x4, scoped, tag = 'scoped memory for tpu_custom_call.1']
    #allocation4 [shape = 's32[1]{0}', space=sflag, size = 0x4, scoped, tag = 'scoped memory for tpu_custom_call.1']
    #allocation5 [shape = 'u8[4096]{0}', space=vmem, size = 0x1000, scoped, tag = 'input window, operand 1, single buffered']
    #allocation6 [shape = 's32[1]{0}', space=sflag, size = 0x4, scoped, tag = 'scoped memory for tpu_custom_call.1']
    #allocation7 [shape = 'u8[1024]{0}', space=vmem, size = 0x400, scoped, tag = 'output window, operand 0, single buffered']
    %7 = vsyncpa [#allocation3], 0
    %8 = vsyncpa [#allocation6], 0
    %9 = vsyncpa [#allocation4], 0
    // Predicated region
    $region2: #{tpu_custom_call.1} parent=1 // pred_check
      _
    $region3: #{tpu_custom_call.1} parent=1 // pred_check_branch
      %11 = sbr.rel (0) target = $region5
    $region4: #{tpu_custom_call.1} parent=1 // pred_region
      %s13 = ssub.s32 1792, 1792
      %14 = vsyncadd [#allocation3], %s13
      %s15 = sshll.u32 [#allocation2], 4
      %s16 = int_to_ptr.vmem [resolvable:$true] %s15
      %21 = dma.hbm_to_vmem [thread:$0]  %s0, 1792, %s16, [#allocation3], 128, 128, 8
    $region5: #{tpu_custom_call.1} parent=1 // pred_fallthru
      _
    // Predicated region
    $region6: #{tpu_custom_call.1} parent=1 // pred_check
      _
    $region7: #{tpu_custom_call.1} parent=1 // pred_check_branch
      %23 = sbr.rel (0) target = $region9
    $region8: #{tpu_custom_call.1} parent=1 // pred_region
      %s25 = ssub.s32 128, 128
      %26 = vsyncadd [#allocation6], %s25
      %s28 = sshll.u32 [#allocation5], 4
      %s29 = int_to_ptr.vmem [resolvable:$true] %s28
      %31 = dma.hbm_to_vmem [thread:$0]  %s1, 128, %s29, [#allocation6]
    $region9: #{tpu_custom_call.1} parent=1 // pred_fallthru
      _
    // Predicated region
    $region10: #{tpu_custom_call.1} parent=1 // pred_check
      _
    $region11: #{tpu_custom_call.1} parent=1 // pred_check_branch
      %33 = sbr.rel (0) target = $region13
    $region12: #{tpu_custom_call.1} parent=1 // pred_region
      %34 = dma.done [#allocation3], 1792
    $region13: #{tpu_custom_call.1} parent=1 // pred_fallthru
      _
    // Predicated region
    $region14: #{tpu_custom_call.1} parent=1 // pred_check
      _
    $region15: #{tpu_custom_call.1} parent=1 // pred_check_branch
      %36 = sbr.rel (0) target = $region17
    $region16: #{tpu_custom_call.1} parent=1 // pred_region
      %37 = dma.done [#allocation6], 128
    $region17: #{tpu_custom_call.1} parent=1 // pred_fallthru
      _
    %v38 = vld [vmem:[#allocation2] sm:$0xff]
    %v39 = vld [vmem:[#allocation2 + $0x8] sm:$0xff]
    %v40 = vld [vmem:[#allocation5] sm:$0xff]
    %vm41 = vcmask 64512
    %v43 = vsel %vm41, %v38, 0
    %v46 = vsel %vm41, %v39, 0
    %48 = vmatprep.subr.mxu0 0.0
    %49 = vmatpush1.msra.mxu0 %v40
    %50 = vmatprep.subr.mxu0 0.0
    %51 = vmatpush1.msra.mxu0 0.0
    %52 = vmatprep.subr.mxu0 0.0
    %53 = vmatpush1.msra.mxu0 0.0
    %54 = vmatprep.subr.mxu0 0.0
    %55 = vmatpush1.msra.mxu0 0.0
    %56 = vmatprep.subr.mxu0 0.0
    %57 = vmatpush1.msra.mxu0 0.0
    %58 = vmatprep.subr.mxu0 0.0
    %59 = vmatpush1.msra.mxu0 0.0
    %60 = vmatprep.subr.mxu0 0.0
    %61 = vmatpush1.msra.mxu0 0.0
    %62 = vmatprep.subr.mxu0 0.0
    %63 = vmatpush1.msra.mxu0 0.0
    %64 = vmatprep.subr.mxu0 0.0
    %65 = vmatpush1.msra.mxu0 0.0
    %66 = vmatprep.subr.mxu0 0.0
    %67 = vmatpush1.msra.mxu0 0.0
    %68 = vmatprep.subr.mxu0 0.0
    %69 = vmatpush1.msra.mxu0 0.0
    %70 = vmatprep.subr.mxu0 0.0
    %71 = vmatpush1.msra.mxu0 0.0
    %72 = vmatprep.subr.mxu0 0.0
    %73 = vmatpush1.msra.mxu0 0.0
    %74 = vmatprep.subr.mxu0 0.0
    %75 = vmatpush1.msra.mxu0 0.0
    %76 = vmatprep.subr.mxu0 0.0
    %77 = vmatpush1.msra.mxu0 0.0
    %78 = vmatprep.subr.mxu0 0.0
    %79 = vmatpush1.msra.mxu0 0.0
    %80 = vmatprep.subr.mxu0 0.0
    %81 = vmatpush1.msra.mxu0 0.0
    %82 = vmatprep.subr.mxu0 0.0
    %83 = vmatpush1.msra.mxu0 0.0
    %84 = vmatprep.subr.mxu0 0.0
    %85 = vmatpush1.msra.mxu0 0.0
    %86 = vmatprep.subr.mxu0 0.0
    %87 = vmatpush1.msra.mxu0 0.0
    %88 = vmatprep.subr.mxu0 0.0
    %89 = vmatpush1.msra.mxu0 0.0
    %90 = vmatprep.subr.mxu0 0.0
    %91 = vmatpush1.msra.mxu0 0.0
    %92 = vmatprep.subr.mxu0 0.0
    %93 = vmatpush1.msra.mxu0 0.0
    %94 = vmatprep.subr.mxu0 0.0
    %95 = vmatpush1.msra.mxu0 0.0
    %96 = vmatprep.subr.mxu0 0.0
    %97 = vmatpush1.msra.mxu0 0.0
    %98 = vmatprep.subr.mxu0 0.0
    %99 = vmatpush1.msra.mxu0 0.0
    %100 = vmatprep.subr.mxu0 0.0
    %101 = vmatpush1.msra.mxu0 0.0
    %102 = vmatprep.subr.mxu0 0.0
    %103 = vmatpush1.msra.mxu0 0.0
    %104 = vmatprep.subr.mxu0 0.0
    %105 = vmatpush1.msra.mxu0 0.0
    %106 = vmatprep.subr.mxu0 0.0
    %107 = vmatpush1.msra.mxu0 0.0
    %108 = vmatprep.subr.mxu0 0.0
    %109 = vmatpush1.msra.mxu0 0.0
    %110 = vmatprep.subr.mxu0 0.0
    %111 = vmatpush1.msra.mxu0 0.0
    %112 = vmatprep.mubr.f32.mxu0 0.0
    %113 = vmatmul.mubr.f32.gmra.mrb[0].mxu0 %v43
    %v114 = vpop.f32.mrb[0].mxu0
    %v115 = vadd.f32 0.0, %v114
    %v116 = vpop.f32.mrb[0].mxu0
    %117 = vmatprep.mubr.f32.mxu0 0.0
    %118 = vmatmul.mubr.f32.gmra.mrb[0].mxu0 %v46
    %v119 = vpop.f32.mrb[0].mxu0
    %v120 = vadd.f32 0.0, %v119
    %v121 = vpop.f32.mrb[0].mxu0
    %122 = vdwg.mxu0
    %v123 = vmax.f32 %v115, 0.0
    %v124 = vmax.f32 %v120, 0.0
    %s125 = scalar_lea.vmem [#allocation2], 16
    %v126 = vld [vmem:[%s125] sm:$0xff]
    %v127 = vld [vmem:[%s125 + $0x8] sm:$0xff]
    %vm128 = vcmask 130048
    %v130 = vsel %vm128, %v126, 0
    %v133 = vsel %vm128, %v127, 0
    %135 = vmatprep.subr.mxu0 0.0
    %136 = vmatpush1.msra.mxu0 %v123
    %137 = vmatprep.subr.mxu0 0.0
    %138 = vmatpush1.msra.mxu0 %v124
    %139 = vmatprep.subr.mxu0 0.0
    %140 = vmatpush1.msra.mxu0 0.0
    %141 = vmatprep.subr.mxu0 0.0
    %142 = vmatpush1.msra.mxu0 0.0
    %143 = vmatprep.subr.mxu0 0.0
    %144 = vmatpush1.msra.mxu0 0.0
    %145 = vmatprep.subr.mxu0 0.0
    %146 = vmatpush1.msra.mxu0 0.0
    %147 = vmatprep.subr.mxu0 0.0
    %148 = vmatpush1.msra.mxu0 0.0
    %149 = vmatprep.subr.mxu0 0.0
    %150 = vmatpush1.msra.mxu0 0.0
    %151 = vmatprep.subr.mxu0 0.0
    %152 = vmatpush1.msra.mxu0 0.0
    %153 = vmatprep.subr.mxu0 0.0
    %154 = vmatpush1.msra.mxu0 0.0
    %155 = vmatprep.subr.mxu0 0.0
    %156 = vmatpush1.msra.mxu0 0.0
    %157 = vmatprep.subr.mxu0 0.0
    %158 = vmatpush1.msra.mxu0 0.0
    %159 = vmatprep.subr.mxu0 0.0
    %160 = vmatpush1.msra.mxu0 0.0
    %161 = vmatprep.subr.mxu0 0.0
    %162 = vmatpush1.msra.mxu0 0.0
    %163 = vmatprep.subr.mxu0 0.0
    %164 = vmatpush1.msra.mxu0 0.0
    %165 = vmatprep.subr.mxu0 0.0
    %166 = vmatpush1.msra.mxu0 0.0
    %167 = vmatprep.subr.mxu0 0.0
    %168 = vmatpush1.msra.mxu0 0.0
    %169 = vmatprep.subr.mxu0 0.0
    %170 = vmatpush1.msra.mxu0 0.0
    %171 = vmatprep.subr.mxu0 0.0
    %172 = vmatpush1.msra.mxu0 0.0
    %173 = vmatprep.subr.mxu0 0.0
    %174 = vmatpush1.msra.mxu0 0.0
    %175 = vmatprep.subr.mxu0 0.0
    %176 = vmatpush1.msra.mxu0 0.0
    %177 = vmatprep.subr.mxu0 0.0
    %178 = vmatpush1.msra.mxu0 0.0
    %179 = vmatprep.subr.mxu0 0.0
    %180 = vmatpush1.msra.mxu0 0.0
    %181 = vmatprep.subr.mxu0 0.0
    %182 = vmatpush1.msra.mxu0 0.0
    %183 = vmatprep.subr.mxu0 0.0
    %184 = vmatpush1.msra.mxu0 0.0
    %185 = vmatprep.subr.mxu0 0.0
    %186 = vmatpush1.msra.mxu0 0.0
    %187 = vmatprep.subr.mxu0 0.0
    %188 = vmatpush1.msra.mxu0 0.0
    %189 = vmatprep.subr.mxu0 0.0
    %190 = vmatpush1.msra.mxu0 0.0
    %191 = vmatprep.subr.mxu0 0.0
    %192 = vmatpush1.msra.mxu0 0.0
    %193 = vmatprep.subr.mxu0 0.0
    %194 = vmatpush1.msra.mxu0 0.0
    %195 = vmatprep.subr.mxu0 0.0
    %196 = vmatpush1.msra.mxu0 0.0
    %197 = vmatprep.subr.mxu0 0.0
    %198 = vmatpush1.msra.mxu0 0.0
    %199 = vmatprep.mubr.f32.mxu0 0.0
    %200 = vmatmul.mubr.f32.gmra.mrb[0].mxu0 %v130
    %v201 = vpop.f32.mrb[0].mxu0
    %v202 = vadd.f32 0.0, %v201
    %v203 = vpop.f32.mrb[0].mxu0
    %204 = vmatprep.mubr.f32.mxu0 0.0
    %205 = vmatmul.mubr.f32.gmra.mrb[0].mxu0 %v133
    %v206 = vpop.f32.mrb[0].mxu0
    %v207 = vadd.f32 0.0, %v206
    %v208 = vpop.f32.mrb[0].mxu0
    %209 = vdwg.mxu0
    %v210 = vmax.f32 %v202, 0.0
    %v211 = vmax.f32 %v207, 0.0
    %s212 = scalar_lea.vmem [#allocation2], 32
    %v213 = vld [vmem:[%s212] sm:$0xff]
    %v214 = vld [vmem:[%s212 + $0x8] sm:$0xff]
    %v216 = vsel %vm128, %v213, 0
    %v219 = vsel %vm128, %v214, 0
    %221 = vmatprep.subr.mxu0 0.0
    %222 = vmatpush1.msra.mxu0 %v210
    %223 = vmatprep.subr.mxu0 0.0
    %224 = vmatpush1.msra.mxu0 %v211
    %225 = vmatprep.subr.mxu0 0.0
    %226 = vmatpush1.msra.mxu0 0.0
    %227 = vmatprep.subr.mxu0 0.0
    %228 = vmatpush1.msra.mxu0 0.0
    %229 = vmatprep.subr.mxu0 0.0
    %230 = vmatpush1.msra.mxu0 0.0
    %231 = vmatprep.subr.mxu0 0.0
    %232 = vmatpush1.msra.mxu0 0.0
    %233 = vmatprep.subr.mxu0 0.0
    %234 = vmatpush1.msra.mxu0 0.0
    %235 = vmatprep.subr.mxu0 0.0
    %236 = vmatpush1.msra.mxu0 0.0
    %237 = vmatprep.subr.mxu0 0.0
    %238 = vmatpush1.msra.mxu0 0.0
    %239 = vmatprep.subr.mxu0 0.0
    %240 = vmatpush1.msra.mxu0 0.0
    %241 = vmatprep.subr.mxu0 0.0
    %242 = vmatpush1.msra.mxu0 0.0
    %243 = vmatprep.subr.mxu0 0.0
    %244 = vmatpush1.msra.mxu0 0.0
    %245 = vmatprep.subr.mxu0 0.0
    %246 = vmatpush1.msra.mxu0 0.0
    %247 = vmatprep.subr.mxu0 0.0
    %248 = vmatpush1.msra.mxu0 0.0
    %249 = vmatprep.subr.mxu0 0.0
    %250 = vmatpush1.msra.mxu0 0.0
    %251 = vmatprep.subr.mxu0 0.0
    %252 = vmatpush1.msra.mxu0 0.0
    %253 = vmatprep.subr.mxu0 0.0
    %254 = vmatpush1.msra.mxu0 0.0
    %255 = vmatprep.subr.mxu0 0.0
    %256 = vmatpush1.msra.mxu0 0.0
    %257 = vmatprep.subr.mxu0 0.0
    %258 = vmatpush1.msra.mxu0 0.0
    %259 = vmatprep.subr.mxu0 0.0
    %260 = vmatpush1.msra.mxu0 0.0
    %261 = vmatprep.subr.mxu0 0.0
    %262 = vmatpush1.msra.mxu0 0.0
    %263 = vmatprep.subr.mxu0 0.0
    %264 = vmatpush1.msra.mxu0 0.0
    %265 = vmatprep.subr.mxu0 0.0
    %266 = vmatpush1.msra.mxu0 0.0
    %267 = vmatprep.subr.mxu0 0.0
    %268 = vmatpush1.msra.mxu0 0.0
    %269 = vmatprep.subr.mxu0 0.0
    %270 = vmatpush1.msra.mxu0 0.0
    %271 = vmatprep.subr.mxu0 0.0
    %272 = vmatpush1.msra.mxu0 0.0
    %273 = vmatprep.subr.mxu0 0.0
    %274 = vmatpush1.msra.mxu0 0.0
    %275 = vmatprep.subr.mxu0 0.0
    %276 = vmatpush1.msra.mxu0 0.0
    %277 = vmatprep.subr.mxu0 0.0
    %278 = vmatpush1.msra.mxu0 0.0
    %279 = vmatprep.subr.mxu0 0.0
    %280 = vmatpush1.msra.mxu0 0.0
    %281 = vmatprep.subr.mxu0 0.0
    %282 = vmatpush1.msra.mxu0 0.0
    %283 = vmatprep.subr.mxu0 0.0
    %284 = vmatpush1.msra.mxu0 0.0
    %285 = vmatprep.mubr.f32.mxu0 0.0
    %286 = vmatmul.mubr.f32.gmra.mrb[0].mxu0 %v216
    %v287 = vpop.f32.mrb[0].mxu0
    %v288 = vadd.f32 0.0, %v287
    %v289 = vpop.f32.mrb[0].mxu0
    %290 = vmatprep.mubr.f32.mxu0 0.0
    %291 = vmatmul.mubr.f32.gmra.mrb[0].mxu0 %v219
    %v292 = vpop.f32.mrb[0].mxu0
    %v293 = vadd.f32 0.0, %v292
    %v294 = vpop.f32.mrb[0].mxu0
    %295 = vdwg.mxu0
    %v296 = vmax.f32 %v288, 0.0
    %v297 = vmax.f32 %v293, 0.0
    %s298 = scalar_lea.vmem [#allocation2], 48
    %v299 = vld [vmem:[%s298] sm:$0xff]
    %v300 = vld [vmem:[%s298 + $0x8] sm:$0xff]
    %v302 = vsel %vm128, %v299, 0
    %v305 = vsel %vm128, %v300, 0
    %307 = vmatprep.subr.mxu0 0.0
    %308 = vmatpush1.msra.mxu0 %v296
    %309 = vmatprep.subr.mxu0 0.0
    %310 = vmatpush1.msra.mxu0 %v297
    %311 = vmatprep.subr.mxu0 0.0
    %312 = vmatpush1.msra.mxu0 0.0
    %313 = vmatprep.subr.mxu0 0.0
    %314 = vmatpush1.msra.mxu0 0.0
    %315 = vmatprep.subr.mxu0 0.0
    %316 = vmatpush1.msra.mxu0 0.0
    %317 = vmatprep.subr.mxu0 0.0
    %318 = vmatpush1.msra.mxu0 0.0
    %319 = vmatprep.subr.mxu0 0.0
    %320 = vmatpush1.msra.mxu0 0.0
    %321 = vmatprep.subr.mxu0 0.0
    %322 = vmatpush1.msra.mxu0 0.0
    %323 = vmatprep.subr.mxu0 0.0
    %324 = vmatpush1.msra.mxu0 0.0
    %325 = vmatprep.subr.mxu0 0.0
    %326 = vmatpush1.msra.mxu0 0.0
    %327 = vmatprep.subr.mxu0 0.0
    %328 = vmatpush1.msra.mxu0 0.0
    %329 = vmatprep.subr.mxu0 0.0
    %330 = vmatpush1.msra.mxu0 0.0
    %331 = vmatprep.subr.mxu0 0.0
    %332 = vmatpush1.msra.mxu0 0.0
    %333 = vmatprep.subr.mxu0 0.0
    %334 = vmatpush1.msra.mxu0 0.0
    %335 = vmatprep.subr.mxu0 0.0
    %336 = vmatpush1.msra.mxu0 0.0
    %337 = vmatprep.subr.mxu0 0.0
    %338 = vmatpush1.msra.mxu0 0.0
    %339 = vmatprep.subr.mxu0 0.0
    %340 = vmatpush1.msra.mxu0 0.0
    %341 = vmatprep.subr.mxu0 0.0
    %342 = vmatpush1.msra.mxu0 0.0
    %343 = vmatprep.subr.mxu0 0.0
    %344 = vmatpush1.msra.mxu0 0.0
    %345 = vmatprep.subr.mxu0 0.0
    %346 = vmatpush1.msra.mxu0 0.0
    %347 = vmatprep.subr.mxu0 0.0
    %348 = vmatpush1.msra.mxu0 0.0
    %349 = vmatprep.subr.mxu0 0.0
    %350 = vmatpush1.msra.mxu0 0.0
    %351 = vmatprep.subr.mxu0 0.0
    %352 = vmatpush1.msra.mxu0 0.0
    %353 = vmatprep.subr.mxu0 0.0
    %354 = vmatpush1.msra.mxu0 0.0
    %355 = vmatprep.subr.mxu0 0.0
    %356 = vmatpush1.msra.mxu0 0.0
    %357 = vmatprep.subr.mxu0 0.0
    %358 = vmatpush1.msra.mxu0 0.0
    %359 = vmatprep.subr.mxu0 0.0
    %360 = vmatpush1.msra.mxu0 0.0
    %361 = vmatprep.subr.mxu0 0.0
    %362 = vmatpush1.msra.mxu0 0.0
    %363 = vmatprep.subr.mxu0 0.0
    %364 = vmatpush1.msra.mxu0 0.0
    %365 = vmatprep.subr.mxu0 0.0
    %366 = vmatpush1.msra.mxu0 0.0
    %367 = vmatprep.subr.mxu0 0.0
    %368 = vmatpush1.msra.mxu0 0.0
    %369 = vmatprep.subr.mxu0 0.0
    %370 = vmatpush1.msra.mxu0 0.0
    %371 = vmatprep.mubr.f32.mxu0 0.0
    %372 = vmatmul.mubr.f32.gmra.mrb[0].mxu0 %v302
    %v373 = vpop.f32.mrb[0].mxu0
    %v374 = vadd.f32 0.0, %v373
    %v375 = vpop.f32.mrb[0].mxu0
    %376 = vmatprep.mubr.f32.mxu0 0.0
    %377 = vmatmul.mubr.f32.gmra.mrb[0].mxu0 %v305
    %v378 = vpop.f32.mrb[0].mxu0
    %v379 = vadd.f32 0.0, %v378
    %v380 = vpop.f32.mrb[0].mxu0
    %381 = vdwg.mxu0
    %v382 = vmax.f32 %v374, 0.0
    %v383 = vmax.f32 %v379, 0.0
    %s384 = scalar_lea.vmem [#allocation2], 64
    %v385 = vld [vmem:[%s384] sm:$0xff]
    %v386 = vld [vmem:[%s384 + $0x8] sm:$0xff]
    %v388 = vsel %vm128, %v385, 0
    %v391 = vsel %vm128, %v386, 0
    %393 = vmatprep.subr.mxu0 0.0
    %394 = vmatpush1.msra.mxu0 %v382
    %395 = vmatprep.subr.mxu0 0.0
    %396 = vmatpush1.msra.mxu0 %v383
    %397 = vmatprep.subr.mxu0 0.0
    %398 = vmatpush1.msra.mxu0 0.0
    %399 = vmatprep.subr.mxu0 0.0
    %400 = vmatpush1.msra.mxu0 0.0
    %401 = vmatprep.subr.mxu0 0.0
    %402 = vmatpush1.msra.mxu0 0.0
    %403 = vmatprep.subr.mxu0 0.0
    %404 = vmatpush1.msra.mxu0 0.0
    %405 = vmatprep.subr.mxu0 0.0
    %406 = vmatpush1.msra.mxu0 0.0
    %407 = vmatprep.subr.mxu0 0.0
    %408 = vmatpush1.msra.mxu0 0.0
    %409 = vmatprep.subr.mxu0 0.0
    %410 = vmatpush1.msra.mxu0 0.0
    %411 = vmatprep.subr.mxu0 0.0
    %412 = vmatpush1.msra.mxu0 0.0
    %413 = vmatprep.subr.mxu0 0.0
    %414 = vmatpush1.msra.mxu0 0.0
    %415 = vmatprep.subr.mxu0 0.0
    %416 = vmatpush1.msra.mxu0 0.0
    %417 = vmatprep.subr.mxu0 0.0
    %418 = vmatpush1.msra.mxu0 0.0
    %419 = vmatprep.subr.mxu0 0.0
    %420 = vmatpush1.msra.mxu0 0.0
    %421 = vmatprep.subr.mxu0 0.0
    %422 = vmatpush1.msra.mxu0 0.0
    %423 = vmatprep.subr.mxu0 0.0
    %424 = vmatpush1.msra.mxu0 0.0
    %425 = vmatprep.subr.mxu0 0.0
    %426 = vmatpush1.msra.mxu0 0.0
    %427 = vmatprep.subr.mxu0 0.0
    %428 = vmatpush1.msra.mxu0 0.0
    %429 = vmatprep.subr.mxu0 0.0
    %430 = vmatpush1.msra.mxu0 0.0
    %431 = vmatprep.subr.mxu0 0.0
    %432 = vmatpush1.msra.mxu0 0.0
    %433 = vmatprep.subr.mxu0 0.0
    %434 = vmatpush1.msra.mxu0 0.0
    %435 = vmatprep.subr.mxu0 0.0
    %436 = vmatpush1.msra.mxu0 0.0
    %437 = vmatprep.subr.mxu0 0.0
    %438 = vmatpush1.msra.mxu0 0.0
    %439 = vmatprep.subr.mxu0 0.0
    %440 = vmatpush1.msra.mxu0 0.0
    %441 = vmatprep.subr.mxu0 0.0
    %442 = vmatpush1.msra.mxu0 0.0
    %443 = vmatprep.subr.mxu0 0.0
    %444 = vmatpush1.msra.mxu0 0.0
    %445 = vmatprep.subr.mxu0 0.0
    %446 = vmatpush1.msra.mxu0 0.0
    %447 = vmatprep.subr.mxu0 0.0
    %448 = vmatpush1.msra.mxu0 0.0
    %449 = vmatprep.subr.mxu0 0.0
    %450 = vmatpush1.msra.mxu0 0.0
    %451 = vmatprep.subr.mxu0 0.0
    %452 = vmatpush1.msra.mxu0 0.0
    %453 = vmatprep.subr.mxu0 0.0
    %454 = vmatpush1.msra.mxu0 0.0
    %455 = vmatprep.subr.mxu0 0.0
    %456 = vmatpush1.msra.mxu0 0.0
    %457 = vmatprep.mubr.f32.mxu0 0.0
    %458 = vmatmul.mubr.f32.gmra.mrb[0].mxu0 %v388
    %v459 = vpop.f32.mrb[0].mxu0
    %v460 = vadd.f32 0.0, %v459
    %v461 = vpop.f32.mrb[0].mxu0
    %462 = vmatprep.mubr.f32.mxu0 0.0
    %463 = vmatmul.mubr.f32.gmra.mrb[0].mxu0 %v391
    %v464 = vpop.f32.mrb[0].mxu0
    %v465 = vadd.f32 0.0, %v464
    %v466 = vpop.f32.mrb[0].mxu0
    %467 = vdwg.mxu0
    %v468 = vmax.f32 %v460, 0.0
    %v469 = vmax.f32 %v465, 0.0
    %s470 = scalar_lea.vmem [#allocation2], 80
    %v471 = vld [vmem:[%s470] sm:$0xff]
    %v472 = vld [vmem:[%s470 + $0x8] sm:$0xff]
    %v474 = vsel %vm128, %v471, 0
    %v477 = vsel %vm128, %v472, 0
    %479 = vmatprep.subr.mxu0 0.0
    %480 = vmatpush1.msra.mxu0 %v468
    %481 = vmatprep.subr.mxu0 0.0
    %482 = vmatpush1.msra.mxu0 %v469
    %483 = vmatprep.subr.mxu0 0.0
    %484 = vmatpush1.msra.mxu0 0.0
    %485 = vmatprep.subr.mxu0 0.0
    %486 = vmatpush1.msra.mxu0 0.0
    %487 = vmatprep.subr.mxu0 0.0
    %488 = vmatpush1.msra.mxu0 0.0
    %489 = vmatprep.subr.mxu0 0.0
    %490 = vmatpush1.msra.mxu0 0.0
    %491 = vmatprep.subr.mxu0 0.0
    %492 = vmatpush1.msra.mxu0 0.0
    %493 = vmatprep.subr.mxu0 0.0
    %494 = vmatpush1.msra.mxu0 0.0
    %495 = vmatprep.subr.mxu0 0.0
    %496 = vmatpush1.msra.mxu0 0.0
    %497 = vmatprep.subr.mxu0 0.0
    %498 = vmatpush1.msra.mxu0 0.0
    %499 = vmatprep.subr.mxu0 0.0
    %500 = vmatpush1.msra.mxu0 0.0
    %501 = vmatprep.subr.mxu0 0.0
    %502 = vmatpush1.msra.mxu0 0.0
    %503 = vmatprep.subr.mxu0 0.0
    %504 = vmatpush1.msra.mxu0 0.0
    %505 = vmatprep.subr.mxu0 0.0
    %506 = vmatpush1.msra.mxu0 0.0
    %507 = vmatprep.subr.mxu0 0.0
    %508 = vmatpush1.msra.mxu0 0.0
    %509 = vmatprep.subr.mxu0 0.0
    %510 = vmatpush1.msra.mxu0 0.0
    %511 = vmatprep.subr.mxu0 0.0
    %512 = vmatpush1.msra.mxu0 0.0
    %513 = vmatprep.subr.mxu0 0.0
    %514 = vmatpush1.msra.mxu0 0.0
    %515 = vmatprep.subr.mxu0 0.0
    %516 = vmatpush1.msra.mxu0 0.0
    %517 = vmatprep.subr.mxu0 0.0
    %518 = vmatpush1.msra.mxu0 0.0
    %519 = vmatprep.subr.mxu0 0.0
    %520 = vmatpush1.msra.mxu0 0.0
    %521 = vmatprep.subr.mxu0 0.0
    %522 = vmatpush1.msra.mxu0 0.0
    %523 = vmatprep.subr.mxu0 0.0
    %524 = vmatpush1.msra.mxu0 0.0
    %525 = vmatprep.subr.mxu0 0.0
    %526 = vmatpush1.msra.mxu0 0.0
    %527 = vmatprep.subr.mxu0 0.0
    %528 = vmatpush1.msra.mxu0 0.0
    %529 = vmatprep.subr.mxu0 0.0
    %530 = vmatpush1.msra.mxu0 0.0
    %531 = vmatprep.subr.mxu0 0.0
    %532 = vmatpush1.msra.mxu0 0.0
    %533 = vmatprep.subr.mxu0 0.0
    %534 = vmatpush1.msra.mxu0 0.0
    %535 = vmatprep.subr.mxu0 0.0
    %536 = vmatpush1.msra.mxu0 0.0
    %537 = vmatprep.subr.mxu0 0.0
    %538 = vmatpush1.msra.mxu0 0.0
    %539 = vmatprep.subr.mxu0 0.0
    %540 = vmatpush1.msra.mxu0 0.0
    %541 = vmatprep.subr.mxu0 0.0
    %542 = vmatpush1.msra.mxu0 0.0
    %543 = vmatprep.mubr.f32.mxu0 0.0
    %544 = vmatmul.mubr.f32.gmra.mrb[0].mxu0 %v474
    %v545 = vpop.f32.mrb[0].mxu0
    %v546 = vadd.f32 0.0, %v545
    %v547 = vpop.f32.mrb[0].mxu0
    %548 = vmatprep.mubr.f32.mxu0 0.0
    %549 = vmatmul.mubr.f32.gmra.mrb[0].mxu0 %v477
    %v550 = vpop.f32.mrb[0].mxu0
    %v551 = vadd.f32 0.0, %v550
    %v552 = vpop.f32.mrb[0].mxu0
    %553 = vdwg.mxu0
    %v554 = vmax.f32 %v546, 0.0
    %v555 = vmax.f32 %v551, 0.0
    %s556 = scalar_lea.vmem [#allocation2], 96
    %v557 = vld [vmem:[%s556] sm:$0xff]
    %v558 = vld [vmem:[%s556 + $0x8] sm:$0xff]
    %v560 = vsel %vm128, %v557, 0
    %v563 = vsel %vm128, %v558, 0
    %565 = vmatprep.subr.mxu0 0.0
    %566 = vmatpush1.msra.mxu0 %v554
    %567 = vmatprep.subr.mxu0 0.0
    %568 = vmatpush1.msra.mxu0 %v555
    %569 = vmatprep.subr.mxu0 0.0
    %570 = vmatpush1.msra.mxu0 0.0
    %571 = vmatprep.subr.mxu0 0.0
    %572 = vmatpush1.msra.mxu0 0.0
    %573 = vmatprep.subr.mxu0 0.0
    %574 = vmatpush1.msra.mxu0 0.0
    %575 = vmatprep.subr.mxu0 0.0
    %576 = vmatpush1.msra.mxu0 0.0
    %577 = vmatprep.subr.mxu0 0.0
    %578 = vmatpush1.msra.mxu0 0.0
    %579 = vmatprep.subr.mxu0 0.0
    %580 = vmatpush1.msra.mxu0 0.0
    %581 = vmatprep.subr.mxu0 0.0
    %582 = vmatpush1.msra.mxu0 0.0
    %583 = vmatprep.subr.mxu0 0.0
    %584 = vmatpush1.msra.mxu0 0.0
    %585 = vmatprep.subr.mxu0 0.0
    %586 = vmatpush1.msra.mxu0 0.0
    %587 = vmatprep.subr.mxu0 0.0
    %588 = vmatpush1.msra.mxu0 0.0
    %589 = vmatprep.subr.mxu0 0.0
    %590 = vmatpush1.msra.mxu0 0.0
    %591 = vmatprep.subr.mxu0 0.0
    %592 = vmatpush1.msra.mxu0 0.0
    %593 = vmatprep.subr.mxu0 0.0
    %594 = vmatpush1.msra.mxu0 0.0
    %595 = vmatprep.subr.mxu0 0.0
    %596 = vmatpush1.msra.mxu0 0.0
    %597 = vmatprep.subr.mxu0 0.0
    %598 = vmatpush1.msra.mxu0 0.0
    %599 = vmatprep.subr.mxu0 0.0
    %600 = vmatpush1.msra.mxu0 0.0
    %601 = vmatprep.subr.mxu0 0.0
    %602 = vmatpush1.msra.mxu0 0.0
    %603 = vmatprep.subr.mxu0 0.0
    %604 = vmatpush1.msra.mxu0 0.0
    %605 = vmatprep.subr.mxu0 0.0
    %606 = vmatpush1.msra.mxu0 0.0
    %607 = vmatprep.subr.mxu0 0.0
    %608 = vmatpush1.msra.mxu0 0.0
    %609 = vmatprep.subr.mxu0 0.0
    %610 = vmatpush1.msra.mxu0 0.0
    %611 = vmatprep.subr.mxu0 0.0
    %612 = vmatpush1.msra.mxu0 0.0
    %613 = vmatprep.subr.mxu0 0.0
    %614 = vmatpush1.msra.mxu0 0.0
    %615 = vmatprep.subr.mxu0 0.0
    %616 = vmatpush1.msra.mxu0 0.0
    %617 = vmatprep.subr.mxu0 0.0
    %618 = vmatpush1.msra.mxu0 0.0
    %619 = vmatprep.subr.mxu0 0.0
    %620 = vmatpush1.msra.mxu0 0.0
    %621 = vmatprep.subr.mxu0 0.0
    %622 = vmatpush1.msra.mxu0 0.0
    %623 = vmatprep.subr.mxu0 0.0
    %624 = vmatpush1.msra.mxu0 0.0
    %625 = vmatprep.subr.mxu0 0.0
    %626 = vmatpush1.msra.mxu0 0.0
    %627 = vmatprep.subr.mxu0 0.0
    %628 = vmatpush1.msra.mxu0 0.0
    %629 = vmatprep.mubr.f32.mxu0 0.0
    %630 = vmatmul.mubr.f32.gmra.mrb[0].mxu0 %v560
    %v631 = vpop.f32.mrb[0].mxu0
    %v632 = vadd.f32 0.0, %v631
    %v633 = vpop.f32.mrb[0].mxu0
    %634 = vmatprep.mubr.f32.mxu0 0.0
    %635 = vmatmul.mubr.f32.gmra.mrb[0].mxu0 %v563
    %v636 = vpop.f32.mrb[0].mxu0
    %v637 = vpop.f32.mrb[0].mxu0
    %638 = vdwg.mxu0
    %639 = vst [vmem:[#allocation7] sm:$0x3] %v632
    // Predicated region
    $region18: #{tpu_custom_call.1} parent=1 // pred_check
      _
    $region19: #{tpu_custom_call.1} parent=1 // pred_check_branch
      %641 = sbr.rel (0) target = $region21
    $region20: #{tpu_custom_call.1} parent=1 // pred_region
      %s643 = ssub.s32 32, 32
      %644 = vsyncadd [#allocation4], %s643
      %s646 = sshll.u32 [#allocation7], 4
      %s647 = int_to_ptr.vmem [resolvable:$true] %s646
      %649 = dma.vmem_to_hbm [thread:$0]  %s647, 32, %s2, [#allocation4]
    $region21: #{tpu_custom_call.1} parent=1 // pred_fallthru
      _
    // Predicated region
    $region22: #{tpu_custom_call.1} parent=1 // pred_check
      _
    $region23: #{tpu_custom_call.1} parent=1 // pred_check_branch
      %651 = sbr.rel (0) target = $region25
    $region24: #{tpu_custom_call.1} parent=1 // pred_region
      %652 = dma.done [#allocation4], 32
    $region25: #{tpu_custom_call.1} parent=1 // pred_fallthru
      _
    %653 = vsyncpa [#allocation3], 1
    %654 = vsyncpa [#allocation6], 1
    %655 = vsyncpa [#allocation4], 1

</llo_original>
